<compile_context>
chip_gen: v7x
topology: tpu7x:2x2x1
jax: 0.10.0
libtpu: 0.0.40
codegen_flags: <defaults>
</compile_context>

<pallas_src>
import math

import jax
import jax.numpy as jnp
from jax import lax
from jax.experimental import pallas as pl
from jax.experimental.pallas import tpu as pltpu


def _sigmoid(x):
    # numerically stable sigmoid routed through the tanh (EUP) unit
    return 0.5 * jnp.tanh(0.5 * x) + 0.5


def _task_rnn_kernel(
    x_ref,        # (tile, E)    bf16   observations
    h_ref,        # (tile, H)    f32    hidden state in
    u_ref,        # (tile, 1)    f32    uniform sample per row
    wx_ref,       # (E, M+H)     bf16   [task_w1 | fc1_w_x] fused
    tw2_ref,      # (M, T)       bf16   task_net layer 2
    ew_ref,       # (T, D)       bf16   embed_net Linear (no bias)
    f1we_ref,     # (D, H)       bf16   fc1 weight, task-embedding half
    wih_ref,      # (H, 3H)      bf16   GRU W_ih^T
    whh_ref,      # (H, 3H)      bf16   GRU W_hh^T
    f2w_ref,      # (H, A)       bf16   fc2
    bias_ref,     # (1, Bpad)    f32    packed [tb1|tb2|ln_g|ln_b|f1b|bih|bhh|f2b]
    out_ref,      # (tile, Cpad) f32    packed [hh | emb | q | ent | 0-pad]
):
    x = x_ref[...]                                # (rows, E)  bf16
    h = h_ref[...]                                # (rows, H)  f32
    u = u_ref[...]                                # (rows, 1)  f32
    rows = x.shape[0]

    H = h.shape[-1]
    M, T = tw2_ref.shape
    D = ew_ref.shape[1]
    A = f2w_ref.shape[1]

    # ---- packed small f32 params, static-offset slices -------------------
    o = 0
    task_b1 = bias_ref[:, o:o + M]; o += M
    task_b2 = bias_ref[:, o:o + T]; o += T
    ln_g = bias_ref[:, o:o + D]; o += D
    ln_b = bias_ref[:, o:o + D]; o += D
    fc1_b = bias_ref[:, o:o + H]; o += H
    gru_bih = bias_ref[:, o:o + 3 * H]; o += 3 * H
    gru_bhh = bias_ref[:, o:o + 3 * H]; o += 3 * H
    fc2_b = bias_ref[:, o:o + A]; o += A

    # ---- single fused matmul for everything that consumes x --------------
    xw = jnp.dot(x, wx_ref[...], preferred_element_type=jnp.float32)  # (rows, M+H)
    t1 = xw[:, 0:M] + task_b1
    t1 = jnp.where(t1 >= 0.0, t1, 0.01 * t1)      # LeakyReLU(0.01)
    fc1_x = xw[:, M:M + H]                        # fc1 contribution from x

    # ---- task_net layer 2 + Softmax ---------------------------------------
    logits = (jnp.dot(t1.astype(jnp.bfloat16), tw2_ref[...],
                      preferred_element_type=jnp.float32) + task_b2)
    mmax = jnp.max(logits, axis=-1, keepdims=True)
    shifted = logits - mmax
    ex = jnp.exp(shifted)
    denom = jnp.sum(ex, axis=-1, keepdims=True)
    probs = ex / denom                            # exact; sums to 1

    # ---- Categorical entropy: H = log(denom) - sum(p * shifted) ----------
    ent = jnp.log(denom) - jnp.sum(probs * shifted, axis=-1, keepdims=True)

    # ---- Categorical sample via inverse CDF (uniform supplied per row) ---
    # inclusive prefix sum: cum[:, j] = sum_{k<=j} probs[:, k]   (i <= j matrix)
    tri = (lax.broadcasted_iota(jnp.int32, (T, T), 0)
           <= lax.broadcasted_iota(jnp.int32, (T, T), 1)).astype(jnp.float32)
    cum = jnp.dot(probs, tri, preferred_element_type=jnp.float32)
    cnt = jnp.sum((u >= cum).astype(jnp.int32), axis=-1, keepdims=True)
    cnt = jnp.minimum(cnt, T - 1)
    iota_t = lax.broadcasted_iota(jnp.int32, (rows, T), 1)
    one_hot = (iota_t == cnt).astype(jnp.bfloat16)        # (rows, T)
    # TODO(synk): the straight-through estimator (one_hot + probs - probs.detach())
    # only matters under autodiff; the forward value is identical to plain one_hot.
    # Wrap this pallas_call in a custom_vjp if gradients through the sample are needed.

    # ---- embed_net: Linear(no bias) -> LayerNorm(eps=1e-5) ----------------
    emb = jnp.dot(one_hot, ew_ref[...], preferred_element_type=jnp.float32)  # (rows, D)
    mu = jnp.mean(emb, axis=-1, keepdims=True)
    var = jnp.mean((emb - mu) ** 2, axis=-1, keepdims=True)
    emb = (emb - mu) * lax.rsqrt(var + 1e-5) * ln_g + ln_b

    # ---- fc1 on concat([inputs, task_embeddings]) + ReLU ------------------
    pre = (fc1_x
           + jnp.dot(emb.astype(jnp.bfloat16), f1we_ref[...],
                     preferred_element_type=jnp.float32)
           + fc1_b)
    xr = jnp.maximum(pre, 0.0)

    # ---- GRUCell (PyTorch semantics, gate order r, z, n) ------------------
    gx = (jnp.dot(xr.astype(jnp.bfloat16), wih_ref[...],
                  preferred_element_type=jnp.float32) + gru_bih)
    gh = (jnp.dot(h.astype(jnp.bfloat16), whh_ref[...],
                  preferred_element_type=jnp.float32) + gru_bhh)
    rz = _sigmoid(gx[:, 0:2 * H] + gh[:, 0:2 * H])
    r = rz[:, 0:H]
    z = rz[:, H:2 * H]
    n = jnp.tanh(gx[:, 2 * H:3 * H] + r * gh[:, 2 * H:3 * H])
    hh = (1.0 - z) * n + z * h

    # ---- fc2 (no layer_norm: args.use_layer_norm defaults to False) -------
    q = (jnp.dot(hh.astype(jnp.bfloat16), f2w_ref[...],
                 preferred_element_type=jnp.float32) + fc2_b)

    # ---- pack outputs and write once (single unmasked lane-dense store) ---
    cols = [hh, emb, q, ent]
    pad = out_ref.shape[-1] - (H + D + A + 1)
    if pad:
        cols.append(jnp.zeros((rows, pad), jnp.float32))
    out_ref[...] = jnp.concatenate(cols, axis=-1).astype(out_ref.dtype)


def _round_up(x, m):
    return ((x + m - 1) // m) * m


def task_rnn_forward(params, inputs, hidden_state, key):
    """inputs: (b, a, e) f32; hidden_state: (b*a, H) f32; key: jax PRNG key."""
    b, a, e = inputs.shape
    N = b * a
    H = params["gru_whh"].shape[0]
    M = params["task_w1"].shape[1]
    T = params["task_w2"].shape[1]
    D = params["embed_w"].shape[1]
    A = params["fc2_w"].shape[1]

    x = inputs.reshape(N, e).astype(jnp.bfloat16)
    h = hidden_state.reshape(N, H).astype(jnp.float32)

    # Row tiling: multiple of 16 (bf16 sublane packing), capped at 1024 rows.
    # The half-N cap guarantees >= 2 grid programs for large N so the
    # "parallel" axis can split across v7x's two TensorCores.
    TILE_ROWS = 1024
    half = _round_up(max(1, -(-N // 2)), 16)
    tile = min(TILE_ROWS, max(16, half))
    n_pad = _round_up(N, tile)
    if n_pad != N:
        x = jnp.pad(x, ((0, n_pad - N), (0, 0)))
        h = jnp.pad(h, ((0, n_pad - N), (0, 0)))

    # Per-row uniform for the categorical sample (wrapper-side RNG: the
    # on-chip pltpu.prng_* path has no interpret/CPU lowering).
    u = jax.random.uniform(key, (n_pad, 1), jnp.float32)

    C = H + D + A + 1
    C_pad = _round_up(C, 128)

    # fused x-consuming weight: [task_net layer-1 | fc1 x-half]
    wx = jnp.concatenate([params["task_w1"], params["fc1_w_x"]], axis=1)  # (e, M+H) bf16

    # packed small f32 params (biases, LayerNorm gamma/beta) in one slab
    bias_parts = [params["task_b1"], params["task_b2"], params["ln_g"],
                  params["ln_b"], params["fc1_b"], params["gru_bih"],
                  params["gru_bhh"], params["fc2_b"]]
    bias_slab = jnp.concatenate(
        [p.reshape(1, -1).astype(jnp.float32) for p in bias_parts], axis=-1)
    b_total = bias_slab.shape[1]
    b_pad = _round_up(b_total, 128)
    if b_pad != b_total:
        bias_slab = jnp.pad(bias_slab, ((0, 0), (0, b_pad - b_total)))

    weights = (
        wx, params["task_w2"], params["embed_w"], params["fc1_w_e"],
        params["gru_wih"], params["gru_whh"], params["fc2_w"], bias_slab,
    )

    def _tiled(width):
        return pl.BlockSpec((tile, width), lambda i: (i, 0))

    def _resident(arr):
        return pl.BlockSpec(arr.shape, lambda i: (0, 0))

    slab = pl.pallas_call(
        _task_rnn_kernel,
        out_shape=jax.ShapeDtypeStruct((n_pad, C_pad), jnp.float32),
        grid=(n_pad // tile,),
        in_specs=[_tiled(e), _tiled(H), _tiled(1)] + [_resident(w) for w in weights],
        out_specs=pl.BlockSpec((tile, C_pad), lambda i: (i, 0)),
        compiler_params=pltpu.CompilerParams(
            dimension_semantics=("parallel",),   # rows independent -> 2 TCs on v7x
        ),
    )(x, h, u, *weights)

    hh = slab[:N, 0:H]
    emb = slab[:N, H:H + D]
    q = slab[:N, H + D:H + D + A]
    ent = slab[:N, H + D + A]

    # TODO(synk): the `task_embeddings`/`mask` override path
    # (th.where(mask, new, old.detach())) is not wired in; this covers the
    # task_embeddings=None branch.
    # TODO(synk): if this step runs inside a time-scan rollout, fold the time
    # loop into the kernel (grid axis over time marked "arbitrary", hidden
    # state carried in VMEM scratch) to amortize launch + h HBM round-trips.
    return (q.reshape(b, a, A),
            hh.reshape(b, a, H),
            emb.reshape(b, a, D),
            ent.reshape(b, a))


def _uniform(key, shape, bound):
    return jax.random.uniform(key, shape, jnp.float32, -bound, bound)


def init_params(key, e, M, T, D, H, A):
    """Parameter init mirroring the PyTorch module's layer shapes.

    Matmul weights are stored pre-transposed ([in, out]) in bf16; biases and
    normalization params stay f32.
    """
    ks = jax.random.split(key, 14)
    bf = jnp.bfloat16
    p = {}
    p["task_w1"] = _uniform(ks[0], (e, M), 1.0 / math.sqrt(e)).astype(bf)
    p["task_b1"] = _uniform(ks[1], (1, M), 1.0 / math.sqrt(e))
    p["task_w2"] = _uniform(ks[2], (M, T), 1.0 / math.sqrt(M)).astype(bf)
    p["task_b2"] = _uniform(ks[3], (1, T), 1.0 / math.sqrt(M))
    p["embed_w"] = _uniform(ks[4], (T, D), 1.0 / math.sqrt(T)).astype(bf)  # Linear(bias=False)
    p["ln_g"] = jnp.ones((1, D), jnp.float32)
    p["ln_b"] = jnp.zeros((1, D), jnp.float32)
    fan = e + D                                             # fc1 input = e + task_emb_dim
    p["fc1_w_x"] = _uniform(ks[5], (e, H), 1.0 / math.sqrt(fan)).astype(bf)
    p["fc1_w_e"] = _uniform(ks[6], (D, H), 1.0 / math.sqrt(fan)).astype(bf)
    p["fc1_b"] = _uniform(ks[7], (1, H), 1.0 / math.sqrt(fan))
    p["gru_wih"] = _uniform(ks[8], (H, 3 * H), 1.0 / math.sqrt(H)).astype(bf)
    p["gru_whh"] = _uniform(ks[9], (H, 3 * H), 1.0 / math.sqrt(H)).astype(bf)
    p["gru_bih"] = _uniform(ks[10], (1, 3 * H), 1.0 / math.sqrt(H))
    p["gru_bhh"] = _uniform(ks[11], (1, 3 * H), 1.0 / math.sqrt(H))
    p["fc2_w"] = _uniform(ks[12], (H, A), 1.0 / math.sqrt(H)).astype(bf)
    p["fc2_b"] = _uniform(ks[13], (1, A), 1.0 / math.sqrt(H))
    return p


if __name__ == "__main__":
    # small config consistent with the module's args
    b, a, input_shape = 2, 3, 16
    mlp_hidden_dim, task_num, task_emb_dim = 32, 8, 16
    rnn_hidden_dim, n_actions = 32, 8

    key = jax.random.PRNGKey(0)
    kparam, kx, ksample = jax.random.split(key, 3)

    params = init_params(kparam, input_shape, mlp_hidden_dim, task_num,
                         task_emb_dim, rnn_hidden_dim, n_actions)
    inputs = jax.random.normal(kx, (b, a, input_shape), dtype=jnp.float32)
    hidden = jnp.zeros((b * a, rnn_hidden_dim), jnp.float32)   # init_hidden() -> zeros

    q, hh, task_emb, entropy = task_rnn_forward(params, inputs, hidden, ksample)
    jax.block_until_ready((q, hh, task_emb, entropy))

    assert q.shape == (b, a, n_actions)
    assert hh.shape == (b, a, rnn_hidden_dim)
    assert task_emb.shape == (b, a, task_emb_dim)
    assert entropy.shape == (b, a)
    assert bool(jnp.all(jnp.isfinite(q)))
    assert bool(jnp.all(jnp.isfinite(hh)))
    assert bool(jnp.all(jnp.isfinite(task_emb)))
    assert bool(jnp.all(entropy >= -1e-2))
    assert bool(jnp.all(entropy <= math.log(task_num) + 0.05))
    print("KERNEL_OK")
</pallas_src>

<mosaic_0001>
module attributes {stable_mosaic.version = 11 : i64} {
  func.func @_task_rnn_kernel(%arg0: i32, %arg1: memref<16x16xbf16, #tpu.memory_space<vmem>>, %arg2: memref<16x32xf32, #tpu.memory_space<vmem>>, %arg3: memref<16x1xf32, #tpu.memory_space<vmem>>, %arg4: memref<16x64xbf16, #tpu.memory_space<vmem>>, %arg5: memref<32x8xbf16, #tpu.memory_space<vmem>>, %arg6: memref<8x16xbf16, #tpu.memory_space<vmem>>, %arg7: memref<16x32xbf16, #tpu.memory_space<vmem>>, %arg8: memref<32x96xbf16, #tpu.memory_space<vmem>>, %arg9: memref<32x96xbf16, #tpu.memory_space<vmem>>, %arg10: memref<32x8xbf16, #tpu.memory_space<vmem>>, %arg11: memref<1x384xf32, #tpu.memory_space<vmem>>, %arg12: memref<16x128xf32, #tpu.memory_space<vmem>>) attributes {dimension_semantics = [#tpu.dimension_semantics<parallel>], iteration_bounds = array<i64: 1>, scalar_prefetch = 0 : i64, scratch_operands = 0 : i64, tpu.core_type = #tpu.core_type<tc>, window_params = [{transform_indices = @transform_0, window_bounds = array<i64: 16, 16>}, {transform_indices = @transform_1, window_bounds = array<i64: 16, 32>}, {transform_indices = @transform_2, window_bounds = array<i64: 16, 1>}, {pipeline_mode = #tpu.pipeline_mode<synchronous>, transform_indices = @transform_3, window_bounds = array<i64: 16, 64>}, {pipeline_mode = #tpu.pipeline_mode<synchronous>, transform_indices = @transform_4, window_bounds = array<i64: 32, 8>}, {pipeline_mode = #tpu.pipeline_mode<synchronous>, transform_indices = @transform_5, window_bounds = array<i64: 8, 16>}, {pipeline_mode = #tpu.pipeline_mode<synchronous>, transform_indices = @transform_6, window_bounds = array<i64: 16, 32>}, {pipeline_mode = #tpu.pipeline_mode<synchronous>, transform_indices = @transform_7, window_bounds = array<i64: 32, 96>}, {pipeline_mode = #tpu.pipeline_mode<synchronous>, transform_indices = @transform_8, window_bounds = array<i64: 32, 96>}, {pipeline_mode = #tpu.pipeline_mode<synchronous>, transform_indices = @transform_9, window_bounds = array<i64: 32, 8>}, {pipeline_mode = #tpu.pipeline_mode<synchronous>, transform_indices = @transform_10, window_bounds = array<i64: 1, 384>}, {transform_indices = @transform_11, window_bounds = array<i64: 16, 128>}]} {
    %c0 = arith.constant 0 : index
    %c0_0 = arith.constant 0 : index
    %0 = vector.load %arg1[%c0, %c0_0] : memref<16x16xbf16, #tpu.memory_space<vmem>>, vector<16x16xbf16>
    %c0_1 = arith.constant 0 : index
    %c0_2 = arith.constant 0 : index
    %1 = vector.load %arg2[%c0_1, %c0_2] : memref<16x32xf32, #tpu.memory_space<vmem>>, vector<16x32xf32>
    %c0_3 = arith.constant 0 : index
    %c0_4 = arith.constant 0 : index
    %2 = vector.load %arg3[%c0_3, %c0_4] : memref<16x1xf32, #tpu.memory_space<vmem>>, vector<16x1xf32>
    %c0_5 = arith.constant 0 : index
    %c0_6 = arith.constant 0 : index
    %3 = vector.load %arg11[%c0_5, %c0_6] : memref<1x384xf32, #tpu.memory_space<vmem>>, vector<1x32xf32>
    %c0_7 = arith.constant 0 : index
    %c32 = arith.constant 32 : index
    %4 = vector.load %arg11[%c0_7, %c32] : memref<1x384xf32, #tpu.memory_space<vmem>>, vector<1x8xf32>
    %c0_8 = arith.constant 0 : index
    %c40 = arith.constant 40 : index
    %5 = vector.load %arg11[%c0_8, %c40] : memref<1x384xf32, #tpu.memory_space<vmem>>, vector<1x16xf32>
    %c0_9 = arith.constant 0 : index
    %c56 = arith.constant 56 : index
    %6 = vector.load %arg11[%c0_9, %c56] : memref<1x384xf32, #tpu.memory_space<vmem>>, vector<1x16xf32>
    %c0_10 = arith.constant 0 : index
    %c72 = arith.constant 72 : index
    %7 = vector.load %arg11[%c0_10, %c72] : memref<1x384xf32, #tpu.memory_space<vmem>>, vector<1x32xf32>
    %c0_11 = arith.constant 0 : index
    %c104 = arith.constant 104 : index
    %8 = vector.load %arg11[%c0_11, %c104] : memref<1x384xf32, #tpu.memory_space<vmem>>, vector<1x96xf32>
    %c0_12 = arith.constant 0 : index
    %c200 = arith.constant 200 : index
    %9 = vector.load %arg11[%c0_12, %c200] : memref<1x384xf32, #tpu.memory_space<vmem>>, vector<1x96xf32>
    %c0_13 = arith.constant 0 : index
    %c296 = arith.constant 296 : index
    %10 = vector.load %arg11[%c0_13, %c296] : memref<1x384xf32, #tpu.memory_space<vmem>>, vector<1x8xf32>
    %c0_14 = arith.constant 0 : index
    %c0_15 = arith.constant 0 : index
    %11 = vector.load %arg4[%c0_14, %c0_15] : memref<16x64xbf16, #tpu.memory_space<vmem>>, vector<16x64xbf16>
    %cst = arith.constant dense<0.000000e+00> : vector<16x64xf32>
    %12 = tpu.matmul %0, %11, %cst {dimension_numbers = #tpu.dot_dimension_numbers<[1], [0], [0], [1], [0, 0, 1, 1], [], []>} : vector<16x16xbf16>, vector<16x64xbf16>, vector<16x64xf32> -> vector<16x64xf32>
    %13 = vector.extract_strided_slice %12 {offsets = [0, 0], sizes = [16, 32], strides = [1, 1]} : vector<16x64xf32> to vector<16x32xf32>
    %14 = vector.broadcast %3 : vector<1x32xf32> to vector<16x32xf32>
    %15 = arith.addf %13, %14 : vector<16x32xf32>
    %cst_16 = arith.constant 0.000000e+00 : f32
    %16 = vector.broadcast %cst_16 : f32 to vector<16x32xf32>
    %17 = arith.cmpf oge, %15, %16 : vector<16x32xf32>
    %cst_17 = arith.constant 0.00999999977 : f32
    %18 = vector.broadcast %cst_17 : f32 to vector<16x32xf32>
    %19 = arith.mulf %18, %15 : vector<16x32xf32>
    %20 = arith.select %17, %15, %19 : vector<16x32xi1>, vector<16x32xf32>
    %21 = vector.extract_strided_slice %12 {offsets = [0, 32], sizes = [16, 32], strides = [1, 1]} : vector<16x64xf32> to vector<16x32xf32>
    %22 = arith.truncf %20 : vector<16x32xf32> to vector<16x32xbf16>
    %c0_18 = arith.constant 0 : index
    %c0_19 = arith.constant 0 : index
    %23 = vector.load %arg5[%c0_18, %c0_19] : memref<32x8xbf16, #tpu.memory_space<vmem>>, vector<32x8xbf16>
    %cst_20 = arith.constant dense<0.000000e+00> : vector<16x8xf32>
    %24 = tpu.matmul %22, %23, %cst_20 {dimension_numbers = #tpu.dot_dimension_numbers<[1], [0], [0], [1], [0, 0, 1, 1], [], []>} : vector<16x32xbf16>, vector<32x8xbf16>, vector<16x8xf32> -> vector<16x8xf32>
    %25 = vector.broadcast %4 : vector<1x8xf32> to vector<16x8xf32>
    %26 = arith.addf %24, %25 : vector<16x8xf32>
    %cst_21 = arith.constant dense<0xFF800000> : vector<16xf32>
    %27 = vector.multi_reduction <maximumf>, %26, %cst_21 [1] : vector<16x8xf32> to vector<16xf32>
    %28 = vector.shape_cast %27 : vector<16xf32> to vector<16x1xf32>
    %29 = vector.broadcast %28 : vector<16x1xf32> to vector<16x8xf32>
    %30 = arith.subf %26, %29 : vector<16x8xf32>
    %31 = math.exp %30 : vector<16x8xf32>
    %cst_22 = arith.constant dense<0.000000e+00> : vector<16xf32>
    %32 = vector.multi_reduction <add>, %31, %cst_22 [1] : vector<16x8xf32> to vector<16xf32>
    %33 = vector.shape_cast %32 : vector<16xf32> to vector<16x1xf32>
    %34 = vector.broadcast %33 : vector<16x1xf32> to vector<16x8xf32>
    %35 = arith.divf %31, %34 : vector<16x8xf32>
    %36 = math.log %33 : vector<16x1xf32>
    %37 = arith.mulf %35, %30 : vector<16x8xf32>
    %cst_23 = arith.constant dense<0.000000e+00> : vector<16xf32>
    %38 = vector.multi_reduction <add>, %37, %cst_23 [1] : vector<16x8xf32> to vector<16xf32>
    %39 = vector.shape_cast %38 : vector<16xf32> to vector<16x1xf32>
    %40 = arith.subf %36, %39 : vector<16x1xf32>
    %41 = tpu.iota {dimensions = array<i32: 0>} : vector<8x8xi32>
    %42 = tpu.iota {dimensions = array<i32: 1>} : vector<8x8xi32>
    %43 = arith.cmpi sle, %41, %42 : vector<8x8xi32>
    %44 = arith.extui %43 : vector<8x8xi1> to vector<8x8xi32>
    %45 = arith.sitofp %44 : vector<8x8xi32> to vector<8x8xf32>
    %cst_24 = arith.constant dense<0.000000e+00> : vector<16x8xf32>
    %46 = tpu.matmul %35, %45, %cst_24 {dimension_numbers = #tpu.dot_dimension_numbers<[1], [0], [0], [1], [0, 0, 1, 1], [], []>} : vector<16x8xf32>, vector<8x8xf32>, vector<16x8xf32> -> vector<16x8xf32>
    %47 = vector.broadcast %2 : vector<16x1xf32> to vector<16x8xf32>
    %48 = arith.cmpf oge, %47, %46 : vector<16x8xf32>
    %49 = arith.extui %48 : vector<16x8xi1> to vector<16x8xi32>
    %cst_25 = arith.constant dense<0> : vector<16xi32>
    %50 = vector.multi_reduction <add>, %49, %cst_25 [1] : vector<16x8xi32> to vector<16xi32>
    %51 = vector.shape_cast %50 : vector<16xi32> to vector<16x1xi32>
    %c7_i32 = arith.constant 7 : i32
    %52 = vector.broadcast %c7_i32 : i32 to vector<16x1xi32>
    %53 = arith.minsi %51, %52 : vector<16x1xi32>
    %54 = tpu.iota {dimensions = array<i32: 1>} : vector<16x8xi32>
    %55 = vector.broadcast %53 : vector<16x1xi32> to vector<16x8xi32>
    %56 = arith.cmpi eq, %54, %55 : vector<16x8xi32>
    %57 = arith.extui %56 : vector<16x8xi1> to vector<16x8xi32>
    %58 = arith.sitofp %57 : vector<16x8xi32> to vector<16x8xf32>
    %59 = arith.truncf %58 : vector<16x8xf32> to vector<16x8xbf16>
    %c0_26 = arith.constant 0 : index
    %c0_27 = arith.constant 0 : index
    %60 = vector.load %arg6[%c0_26, %c0_27] : memref<8x16xbf16, #tpu.memory_space<vmem>>, vector<8x16xbf16>
    %cst_28 = arith.constant dense<0.000000e+00> : vector<16x16xf32>
    %61 = tpu.matmul %59, %60, %cst_28 {dimension_numbers = #tpu.dot_dimension_numbers<[1], [0], [0], [1], [0, 0, 1, 1], [], []>} : vector<16x8xbf16>, vector<8x16xbf16>, vector<16x16xf32> -> vector<16x16xf32>
    %cst_29 = arith.constant dense<0.000000e+00> : vector<16xf32>
    %62 = vector.multi_reduction <add>, %61, %cst_29 [1] : vector<16x16xf32> to vector<16xf32>
    %63 = vector.shape_cast %62 : vector<16xf32> to vector<16x1xf32>
    %cst_30 = arith.constant 1.600000e+01 : f32
    %64 = vector.broadcast %cst_30 : f32 to vector<16x1xf32>
    %65 = arith.divf %63, %64 : vector<16x1xf32>
    %66 = vector.broadcast %65 : vector<16x1xf32> to vector<16x16xf32>
    %67 = arith.subf %61, %66 : vector<16x16xf32>
    %68 = arith.mulf %67, %67 : vector<16x16xf32>
    %cst_31 = arith.constant dense<0.000000e+00> : vector<16xf32>
    %69 = vector.multi_reduction <add>, %68, %cst_31 [1] : vector<16x16xf32> to vector<16xf32>
    %70 = vector.shape_cast %69 : vector<16xf32> to vector<16x1xf32>
    %cst_32 = arith.constant 1.600000e+01 : f32
    %71 = vector.broadcast %cst_32 : f32 to vector<16x1xf32>
    %72 = arith.divf %70, %71 : vector<16x1xf32>
    %73 = vector.broadcast %65 : vector<16x1xf32> to vector<16x16xf32>
    %74 = arith.subf %61, %73 : vector<16x16xf32>
    %cst_33 = arith.constant 9.99999974E-6 : f32
    %75 = vector.broadcast %cst_33 : f32 to vector<16x1xf32>
    %76 = arith.addf %72, %75 : vector<16x1xf32>
    %77 = math.rsqrt %76 : vector<16x1xf32>
    %78 = vector.broadcast %77 : vector<16x1xf32> to vector<16x16xf32>
    %79 = arith.mulf %74, %78 : vector<16x16xf32>
    %80 = vector.broadcast %5 : vector<1x16xf32> to vector<16x16xf32>
    %81 = arith.mulf %79, %80 : vector<16x16xf32>
    %82 = vector.broadcast %6 : vector<1x16xf32> to vector<16x16xf32>
    %83 = arith.addf %81, %82 : vector<16x16xf32>
    %84 = arith.truncf %83 : vector<16x16xf32> to vector<16x16xbf16>
    %c0_34 = arith.constant 0 : index
    %c0_35 = arith.constant 0 : index
    %85 = vector.load %arg7[%c0_34, %c0_35] : memref<16x32xbf16, #tpu.memory_space<vmem>>, vector<16x32xbf16>
    %cst_36 = arith.constant dense<0.000000e+00> : vector<16x32xf32>
    %86 = tpu.matmul %84, %85, %cst_36 {dimension_numbers = #tpu.dot_dimension_numbers<[1], [0], [0], [1], [0, 0, 1, 1], [], []>} : vector<16x16xbf16>, vector<16x32xbf16>, vector<16x32xf32> -> vector<16x32xf32>
    %87 = arith.addf %21, %86 : vector<16x32xf32>
    %88 = vector.broadcast %7 : vector<1x32xf32> to vector<16x32xf32>
    %89 = arith.addf %87, %88 : vector<16x32xf32>
    %cst_37 = arith.constant 0.000000e+00 : f32
    %90 = vector.broadcast %cst_37 : f32 to vector<16x32xf32>
    %91 = arith.maximumf %89, %90 : vector<16x32xf32>
    %92 = arith.truncf %91 : vector<16x32xf32> to vector<16x32xbf16>
    %c0_38 = arith.constant 0 : index
    %c0_39 = arith.constant 0 : index
    %93 = vector.load %arg8[%c0_38, %c0_39] : memref<32x96xbf16, #tpu.memory_space<vmem>>, vector<32x96xbf16>
    %cst_40 = arith.constant dense<0.000000e+00> : vector<16x96xf32>
    %94 = tpu.matmul %92, %93, %cst_40 {dimension_numbers = #tpu.dot_dimension_numbers<[1], [0], [0], [1], [0, 0, 1, 1], [], []>} : vector<16x32xbf16>, vector<32x96xbf16>, vector<16x96xf32> -> vector<16x96xf32>
    %95 = vector.broadcast %8 : vector<1x96xf32> to vector<16x96xf32>
    %96 = arith.addf %94, %95 : vector<16x96xf32>
    %97 = arith.truncf %1 : vector<16x32xf32> to vector<16x32xbf16>
    %c0_41 = arith.constant 0 : index
    %c0_42 = arith.constant 0 : index
    %98 = vector.load %arg9[%c0_41, %c0_42] : memref<32x96xbf16, #tpu.memory_space<vmem>>, vector<32x96xbf16>
    %cst_43 = arith.constant dense<0.000000e+00> : vector<16x96xf32>
    %99 = tpu.matmul %97, %98, %cst_43 {dimension_numbers = #tpu.dot_dimension_numbers<[1], [0], [0], [1], [0, 0, 1, 1], [], []>} : vector<16x32xbf16>, vector<32x96xbf16>, vector<16x96xf32> -> vector<16x96xf32>
    %100 = vector.broadcast %9 : vector<1x96xf32> to vector<16x96xf32>
    %101 = arith.addf %99, %100 : vector<16x96xf32>
    %102 = vector.extract_strided_slice %96 {offsets = [0, 0], sizes = [16, 64], strides = [1, 1]} : vector<16x96xf32> to vector<16x64xf32>
    %103 = vector.extract_strided_slice %101 {offsets = [0, 0], sizes = [16, 64], strides = [1, 1]} : vector<16x96xf32> to vector<16x64xf32>
    %104 = arith.addf %102, %103 : vector<16x64xf32>
    %cst_44 = arith.constant 5.000000e-01 : f32
    %105 = vector.broadcast %cst_44 : f32 to vector<16x64xf32>
    %106 = arith.mulf %105, %104 : vector<16x64xf32>
    %107 = math.tanh %106 : vector<16x64xf32>
    %cst_45 = arith.constant 5.000000e-01 : f32
    %108 = vector.broadcast %cst_45 : f32 to vector<16x64xf32>
    %109 = arith.mulf %108, %107 : vector<16x64xf32>
    %cst_46 = arith.constant 5.000000e-01 : f32
    %110 = vector.broadcast %cst_46 : f32 to vector<16x64xf32>
    %111 = arith.addf %109, %110 : vector<16x64xf32>
    %112 = vector.extract_strided_slice %111 {offsets = [0, 0], sizes = [16, 32], strides = [1, 1]} : vector<16x64xf32> to vector<16x32xf32>
    %113 = vector.extract_strided_slice %111 {offsets = [0, 32], sizes = [16, 32], strides = [1, 1]} : vector<16x64xf32> to vector<16x32xf32>
    %114 = vector.extract_strided_slice %96 {offsets = [0, 64], sizes = [16, 32], strides = [1, 1]} : vector<16x96xf32> to vector<16x32xf32>
    %115 = vector.extract_strided_slice %101 {offsets = [0, 64], sizes = [16, 32], strides = [1, 1]} : vector<16x96xf32> to vector<16x32xf32>
    %116 = arith.mulf %112, %115 : vector<16x32xf32>
    %117 = arith.addf %114, %116 : vector<16x32xf32>
    %118 = math.tanh %117 : vector<16x32xf32>
    %cst_47 = arith.constant 1.000000e+00 : f32
    %119 = vector.broadcast %cst_47 : f32 to vector<16x32xf32>
    %120 = arith.subf %119, %113 : vector<16x32xf32>
    %121 = arith.mulf %120, %118 : vector<16x32xf32>
    %122 = arith.mulf %113, %1 : vector<16x32xf32>
    %123 = arith.addf %121, %122 : vector<16x32xf32>
    %124 = arith.truncf %123 : vector<16x32xf32> to vector<16x32xbf16>
    %c0_48 = arith.constant 0 : index
    %c0_49 = arith.constant 0 : index
    %125 = vector.load %arg10[%c0_48, %c0_49] : memref<32x8xbf16, #tpu.memory_space<vmem>>, vector<32x8xbf16>
    %cst_50 = arith.constant dense<0.000000e+00> : vector<16x8xf32>
    %126 = tpu.matmul %124, %125, %cst_50 {dimension_numbers = #tpu.dot_dimension_numbers<[1], [0], [0], [1], [0, 0, 1, 1], [], []>} : vector<16x32xbf16>, vector<32x8xbf16>, vector<16x8xf32> -> vector<16x8xf32>
    %127 = vector.broadcast %10 : vector<1x8xf32> to vector<16x8xf32>
    %128 = arith.addf %126, %127 : vector<16x8xf32>
    %cst_51 = arith.constant 0.000000e+00 : f32
    %129 = vector.broadcast %cst_51 : f32 to vector<16x71xf32>
    %130 = tpu.concatenate %123, %83, %128, %40, %129 in 1 : vector<16x32xf32>, vector<16x16xf32>, vector<16x8xf32>, vector<16x1xf32>, vector<16x71xf32> -> vector<16x128xf32>
    %c0_52 = arith.constant 0 : index
    %c0_53 = arith.constant 0 : index
    %131 = vector.load %arg12[%c0_52, %c0_53] : memref<16x128xf32, #tpu.memory_space<vmem>>, vector<16x128xf32>
    tpu.vector_store %arg12[%c0_52, %c0_53], %130 {strides = array<i32>} : memref<16x128xf32, #tpu.memory_space<vmem>>, vector<16x128xf32>,
    return
  }
  func.func @transform_0(%arg0: i32) -> (i32, i32) {
    %c0_i32 = arith.constant 0 : i32
    %c0_i32_0 = arith.constant 0 : i32
    return %arg0, %c0_i32 : i32, i32
  }
  func.func @transform_1(%arg0: i32) -> (i32, i32) {
    %c0_i32 = arith.constant 0 : i32
    %c0_i32_0 = arith.constant 0 : i32
    return %arg0, %c0_i32 : i32, i32
  }
  func.func @transform_2(%arg0: i32) -> (i32, i32) {
    %c0_i32 = arith.constant 0 : i32
    %c0_i32_0 = arith.constant 0 : i32
    return %arg0, %c0_i32 : i32, i32
  }
  func.func @transform_3(%arg0: i32) -> (i32, i32) {
    %c0_i32 = arith.constant 0 : i32
    %c0_i32_0 = arith.constant 0 : i32
    %c0_i32_1 = arith.constant 0 : i32
    return %c0_i32, %c0_i32_0 : i32, i32
  }
  func.func @transform_4(%arg0: i32) -> (i32, i32) {
    %c0_i32 = arith.constant 0 : i32
    %c0_i32_0 = arith.constant 0 : i32
    %c0_i32_1 = arith.constant 0 : i32
    return %c0_i32, %c0_i32_0 : i32, i32
  }
  func.func @transform_5(%arg0: i32) -> (i32, i32) {
    %c0_i32 = arith.constant 0 : i32
    %c0_i32_0 = arith.constant 0 : i32
    %c0_i32_1 = arith.constant 0 : i32
    return %c0_i32, %c0_i32_0 : i32, i32
  }
  func.func @transform_6(%arg0: i32) -> (i32, i32) {
    %c0_i32 = arith.constant 0 : i32
    %c0_i32_0 = arith.constant 0 : i32
    %c0_i32_1 = arith.constant 0 : i32
    return %c0_i32, %c0_i32_0 : i32, i32
  }
  func.func @transform_7(%arg0: i32) -> (i32, i32) {
    %c0_i32 = arith.constant 0 : i32
    %c0_i32_0 = arith.constant 0 : i32
    %c0_i32_1 = arith.constant 0 : i32
    return %c0_i32, %c0_i32_0 : i32, i32
  }
  func.func @transform_8(%arg0: i32) -> (i32, i32) {
    %c0_i32 = arith.constant 0 : i32
    %c0_i32_0 = arith.constant 0 : i32
    %c0_i32_1 = arith.constant 0 : i32
    return %c0_i32, %c0_i32_0 : i32, i32
  }
  func.func @transform_9(%arg0: i32) -> (i32, i32) {
    %c0_i32 = arith.constant 0 : i32
    %c0_i32_0 = arith.constant 0 : i32
    %c0_i32_1 = arith.constant 0 : i32
    return %c0_i32, %c0_i32_0 : i32, i32
  }
  func.func @transform_10(%arg0: i32) -> (i32, i32) {
    %c0_i32 = arith.constant 0 : i32
    %c0_i32_0 = arith.constant 0 : i32
    %c0_i32_1 = arith.constant 0 : i32
    return %c0_i32, %c0_i32_0 : i32, i32
  }
  func.func @transform_11(%arg0: i32) -> (i32, i32) {
    %c0_i32 = arith.constant 0 : i32
    %c0_i32_0 = arith.constant 0 : i32
    return %arg0, %c0_i32 : i32, i32
  }
}

</mosaic_0001>

<llo_original>
// kernel: tpu_custom_call.1
$region0: #{tpu_custom_call.1}
  #allocation0 [shape = 'u32[]', space=smem, size = 0x4, offset = 0x4, fixed_abs, tag = 'smem constant byte address 0x4 - core index']
  #allocation1 [shape = 'u32[144,128]{1,0:T(1,128)}', space=vmem, size = 0x12000, scoped, tag = 'internal scratch']
  %s0 = inlined_call_operand.vmem [shape: bf16[16,16], index: 0, kind: input, shape index: {}]
  %s1 = inlined_call_operand.vmem [shape: f32[16,32], index: 1, kind: input, shape index: {}]
  %s2 = inlined_call_operand.vmem [shape: f32[16,1], index: 2, kind: input, shape index: {}]
  %s3 = inlined_call_operand.vmem [shape: bf16[16,64], index: 3, kind: input, shape index: {}]
  %s4 = inlined_call_operand.vmem [shape: bf16[32,8], index: 4, kind: input, shape index: {}]
  %s5 = inlined_call_operand.hbm [shape: bf16[8,16], index: 5, kind: input, shape index: {}]
  %s6 = inlined_call_operand.vmem [shape: bf16[16,32], index: 6, kind: input, shape index: {}]
  %s7 = inlined_call_operand.vmem [shape: bf16[32,96], index: 7, kind: input, shape index: {}]
  %s8 = inlined_call_operand.vmem [shape: bf16[32,96], index: 8, kind: input, shape index: {}]
  %s9 = inlined_call_operand.vmem [shape: bf16[32,8], index: 9, kind: input, shape index: {}]
  %s10 = inlined_call_operand.vmem [shape: f32[1,384], index: 10, kind: input, shape index: {}]
  %s11 = inlined_call_operand.hbm [shape: f32[16,128], index: 11, kind: output, shape index: {}]
  %s12 = sld [smem:[#allocation0]]
  $region58: #{tpu_custom_call.1} parent=0
    _
  %s14 = ssub.s32 1, %s12
  %s15 = scalar_select 0, %s14, %s12
  $region1: #{tpu_custom_call.1} parent=0
    #allocation2 [shape = 'u8[2048]{0}', space=vmem, size = 0x800, scoped, tag = 'input window, operand 5, single buffered']
    #allocation3 [shape = 's32[1]{0}', space=sflag, size = 0x4, scoped, tag = 'scoped memory for tpu_custom_call.1']
    #allocation4 [shape = 's32[1]{0}', space=sflag, size = 0x4, scoped, tag = 'scoped memory for tpu_custom_call.1']
    #allocation5 [shape = 'u8[8192]{0}', space=vmem, size = 0x2000, scoped, tag = 'output window, operand 0, single buffered']
    %16 = vsyncpa [#allocation3], 0
    %17 = vsyncpa [#allocation4], 0
    // Predicated region
    $region2: #{tpu_custom_call.1} parent=1 // pred_check
      _
    $region3: #{tpu_custom_call.1} parent=1 // pred_check_branch
      %19 = sbr.rel (0) target = $region5
    $region4: #{tpu_custom_call.1} parent=1 // pred_region
      _
    $region5: #{tpu_custom_call.1} parent=1 // pred_fallthru
      _
    // Predicated region
    $region6: #{tpu_custom_call.1} parent=1 // pred_check
      _
    $region7: #{tpu_custom_call.1} parent=1 // pred_check_branch
      %21 = sbr.rel (0) target = $region9
    $region8: #{tpu_custom_call.1} parent=1 // pred_region
      _
    $region9: #{tpu_custom_call.1} parent=1 // pred_fallthru
      _
    // Predicated region
    $region10: #{tpu_custom_call.1} parent=1 // pred_check
      _
    $region11: #{tpu_custom_call.1} parent=1 // pred_check_branch
      %23 = sbr.rel (0) target = $region13
    $region12: #{tpu_custom_call.1} parent=1 // pred_region
      _
    $region13: #{tpu_custom_call.1} parent=1 // pred_fallthru
      _
    // Predicated region
    $region14: #{tpu_custom_call.1} parent=1 // pred_check
      _
    $region15: #{tpu_custom_call.1} parent=1 // pred_check_branch
      %25 = sbr.rel (0) target = $region17
    $region16: #{tpu_custom_call.1} parent=1 // pred_region
      _
    $region17: #{tpu_custom_call.1} parent=1 // pred_fallthru
      _
    // Predicated region
    $region18: #{tpu_custom_call.1} parent=1 // pred_check
      _
    $region19: #{tpu_custom_call.1} parent=1 // pred_check_branch
      %27 = sbr.rel (0) target = $region21
    $region20: #{tpu_custom_call.1} parent=1 // pred_region
      _
    $region21: #{tpu_custom_call.1} parent=1 // pred_fallthru
      _
    // Predicated region
    $region22: #{tpu_custom_call.1} parent=1 // pred_check
      _
    $region23: #{tpu_custom_call.1} parent=1 // pred_check_branch
      %29 = sbr.rel (0) target = $region25
    $region24: #{tpu_custom_call.1} parent=1 // pred_region
      %s31 = ssub.s32 64, 64
      %32 = vsyncadd [#allocation3], %s31
      %s34 = sshll.u32 [#allocation2], 4
      %s35 = int_to_ptr.vmem [resolvable:$true] %s34
      %37 = dma.hbm_to_vmem [thread:$0]  %s5, 64, %s35, [#allocation3]
    $region25: #{tpu_custom_call.1} parent=1 // pred_fallthru
      _
    // Predicated region
    $region26: #{tpu_custom_call.1} parent=1 // pred_check
      _
    $region27: #{tpu_custom_call.1} parent=1 // pred_check_branch
      %39 = sbr.rel (0) target = $region29
    $region28: #{tpu_custom_call.1} parent=1 // pred_region
      _
    $region29: #{tpu_custom_call.1} parent=1 // pred_fallthru
      _
    // Predicated region
    $region30: #{tpu_custom_call.1} parent=1 // pred_check
      _
    $region31: #{tpu_custom_call.1} parent=1 // pred_check_branch
      %41 = sbr.rel (0) target = $region33
    $region32: #{tpu_custom_call.1} parent=1 // pred_region
      _
    $region33: #{tpu_custom_call.1} parent=1 // pred_fallthru
      _
    // Predicated region
    $region34: #{tpu_custom_call.1} parent=1 // pred_check
      _
    $region35: #{tpu_custom_call.1} parent=1 // pred_check_branch
      %43 = sbr.rel (0) target = $region37
    $region36: #{tpu_custom_call.1} parent=1 // pred_region
      _
    $region37: #{tpu_custom_call.1} parent=1 // pred_fallthru
      _
    // Predicated region
    $region38: #{tpu_custom_call.1} parent=1 // pred_check
      _
    $region39: #{tpu_custom_call.1} parent=1 // pred_check_branch
      %45 = sbr.rel (0) target = $region41
    $region40: #{tpu_custom_call.1} parent=1 // pred_region
      _
    $region41: #{tpu_custom_call.1} parent=1 // pred_fallthru
      _
    // Predicated region
    $region42: #{tpu_custom_call.1} parent=1 // pred_check
      _
    $region43: #{tpu_custom_call.1} parent=1 // pred_check_branch
      %47 = sbr.rel (0) target = $region45
    $region44: #{tpu_custom_call.1} parent=1 // pred_region
      _
    $region45: #{tpu_custom_call.1} parent=1 // pred_fallthru
      _
    // Predicated region
    $region46: #{tpu_custom_call.1} parent=1 // pred_check
      _
    $region47: #{tpu_custom_call.1} parent=1 // pred_check_branch
      %49 = sbr.rel (0) target = $region49
    $region48: #{tpu_custom_call.1} parent=1 // pred_region
      %50 = dma.done [#allocation3], 64
    $region49: #{tpu_custom_call.1} parent=1 // pred_fallthru
      _
    %v52 = vld [vmem:[%s0] sm:$0xf]
    %v53 = vld [vmem:[%s0 + $0x4] sm:$0xf]
    %v54 = vld [vmem:[%s1] sm:$0xff]
    %v55 = vld [vmem:[%s1 + $0x8] sm:$0xff]
    %v56 = vld [vmem:[%s2] sm:$0xff]
    %v57 = vld [vmem:[%s2 + $0x8] sm:$0xff]
    %v58 = vld [vmem:[%s10] sm:$0x1]
    %v59 = vld [vmem:[%s10] sm:$0x3]
    %v60 = vld [vmem:[%s10 + $0x1] sm:$0x3]
    %v61 = vld [vmem:[%s10 + $0x2] sm:$0x1]
    %v62 = vld [vmem:[%s3] sm:$0xf]
    %v63 = vld [vmem:[%s3 + $0x4] sm:$0xf]
    %v66 = vunpack.c.l.b16 %v52
    %v67 = vunpack.c.l.b16 %v53
    %v68 = vpack.c.b16 %v67, %v66
    %v71 = vunpack.c.l.b16 %v62
    %v72 = vunpack.c.l.b16 %v63
    %v73 = vpack.c.b16 %v72, %v71
    %vm75 = vcmask 130048
    %v77 = vsel %vm75, %v68, 0
    %79 = vmatprep.subr.bf16.mxu0 0
    %80 = vmatpush1.bf16.msra.mxu0 %v73
    %81 = vmatprep.subr.bf16.mxu0 0
    %82 = vmatpush1.bf16.msra.mxu0 0
    %83 = vmatprep.subr.bf16.mxu0 0
    %84 = vmatpush1.bf16.msra.mxu0 0
    %85 = vmatprep.subr.bf16.mxu0 0
    %86 = vmatpush1.bf16.msra.mxu0 0
    %87 = vmatprep.subr.bf16.mxu0 0
    %88 = vmatpush1.bf16.msra.mxu0 0
    %89 = vmatprep.subr.bf16.mxu0 0
    %90 = vmatpush1.bf16.msra.mxu0 0
    %91 = vmatprep.subr.bf16.mxu0 0
    %92 = vmatpush1.bf16.msra.mxu0 0
    %93 = vmatprep.subr.bf16.mxu0 0
    %94 = vmatpush1.bf16.msra.mxu0 0
    %95 = vmatprep.subr.bf16.mxu0 0
    %96 = vmatpush1.bf16.msra.mxu0 0
    %97 = vmatprep.subr.bf16.mxu0 0
    %98 = vmatpush1.bf16.msra.mxu0 0
    %99 = vmatprep.subr.bf16.mxu0 0
    %100 = vmatpush1.bf16.msra.mxu0 0
    %101 = vmatprep.subr.bf16.mxu0 0
    %102 = vmatpush1.bf16.msra.mxu0 0
    %103 = vmatprep.subr.bf16.mxu0 0
    %104 = vmatpush1.bf16.msra.mxu0 0
    %105 = vmatprep.subr.bf16.mxu0 0
    %106 = vmatpush1.bf16.msra.mxu0 0
    %107 = vmatprep.subr.bf16.mxu0 0
    %108 = vmatpush1.bf16.msra.mxu0 0
    %109 = vmatprep.subr.bf16.mxu0 0
    %110 = vmatpush1.bf16.msra.mxu0 0
    %111 = vmatprep.mubr.bf16.mxu0 0
    %112 = vmatmul.mubr.bf16.gmra.mrb[0].mxu0 %v77
    %v113 = vpop.f32.mrb[0].mxu0
    %v114 = vadd.f32 0.0, %v113
    %v115 = vpop.f32.mrb[0].mxu0
    %v116 = vpop.f32.mrb[0].mxu0
    %v117 = vadd.f32 0.0, %v116
    %v118 = vpop.f32.mrb[0].mxu0
    %119 = vdwg.mxu0
    %v121 = vlaneseq
    %v122 = vshrl.u32 %v121, 7
    %v123 = vsub.s32 0, %v122
    %v124 = vrot.slane %v58, %v123
    %v126 = vadd.f32 %v114, %v124
    %v127 = vadd.f32 %v117, %v124
    %vm128 = vcmp.ge.f32.partialorder %v126, 0.0
    %vm129 = vcmp.ge.f32.partialorder %v127, 0.0
    %v130 = vmul.f32 %v126, 0.01
    %v131 = vmul.f32 %v127, 0.01
    %v132 = vsel %vm128, %v126, %v130
    %v133 = vsel %vm129, %v127, %v131
    %v134 = vpack.c.bf16 %v133, %v132
    %v135 = vld [vmem:[%s4] sm:$0xf]
    %v136 = vld [vmem:[%s4 + $0x4] sm:$0xf]
    %v137 = vld [vmem:[%s4 + $0x8] sm:$0xf]
    %v138 = vld [vmem:[%s4 + $0xc] sm:$0xf]
    %v143 = vunpack.c.l.b16 %v135
    %v144 = vunpack.c.l.b16 %v136
    %v145 = vunpack.c.l.b16 %v137
    %v146 = vunpack.c.l.b16 %v138
    %v147 = vpack.c.b16 %v144, %v143
    %v148 = vpack.c.b16 %v146, %v145
    %151 = vrot.lane.b32.xlu0 %v124, 96
    %v152 = vpop.permute.xlu0 %151
    %vm154 = vcmask 261120
    %v156 = vsel %vm154, %v134, 0
    %158 = vmatprep.subr.bf16.mxu0 0
    %159 = vmatpush1.bf16.msra.mxu0 %v147
    %160 = vmatprep.subr.bf16.mxu0 0
    %161 = vmatpush1.bf16.msra.mxu0 %v148
    %162 = vmatprep.subr.bf16.mxu0 0
    %163 = vmatpush1.bf16.msra.mxu0 0
    %164 = vmatprep.subr.bf16.mxu0 0
    %165 = vmatpush1.bf16.msra.mxu0 0
    %166 = vmatprep.subr.bf16.mxu0 0
    %167 = vmatpush1.bf16.msra.mxu0 0
    %168 = vmatprep.subr.bf16.mxu0 0
    %169 = vmatpush1.bf16.msra.mxu0 0
    %170 = vmatprep.subr.bf16.mxu0 0
    %171 = vmatpush1.bf16.msra.mxu0 0
    %172 = vmatprep.subr.bf16.mxu0 0
    %173 = vmatpush1.bf16.msra.mxu0 0
    %174 = vmatprep.subr.bf16.mxu0 0
    %175 = vmatpush1.bf16.msra.mxu0 0
    %176 = vmatprep.subr.bf16.mxu0 0
    %177 = vmatpush1.bf16.msra.mxu0 0
    %178 = vmatprep.subr.bf16.mxu0 0
    %179 = vmatpush1.bf16.msra.mxu0 0
    %180 = vmatprep.subr.bf16.mxu0 0
    %181 = vmatpush1.bf16.msra.mxu0 0
    %182 = vmatprep.subr.bf16.mxu0 0
    %183 = vmatpush1.bf16.msra.mxu0 0
    %184 = vmatprep.subr.bf16.mxu0 0
    %185 = vmatpush1.bf16.msra.mxu0 0
    %186 = vmatprep.subr.bf16.mxu0 0
    %187 = vmatpush1.bf16.msra.mxu0 0
    %188 = vmatprep.subr.bf16.mxu0 0
    %189 = vmatpush1.bf16.msra.mxu0 0
    %190 = vmatprep.mubr.bf16.mxu0 0
    %191 = vmatmul.mubr.bf16.gmra.mrb[0].mxu0 %v156
    %v192 = vpop.f32.mrb[0].mxu0
    %v193 = vadd.f32 %v152, %v192
    %v194 = vpop.f32.mrb[0].mxu0
    %v195 = vpop.f32.mrb[0].mxu0
    %v196 = vadd.f32 %v152, %v195
    %v197 = vpop.f32.mrb[0].mxu0
    %198 = vdwg.mxu0
    %vm199 = vcmask 64512
    %v200 = vsel %vm199, %v193, -inf
    %201 = vmax.xlane.f32.xlu0 %v200
    %v202 = vpop.xlane.xlu0 %201
    %v203 = vsel %vm199, %v196, -inf
    %204 = vmax.xlane.f32.xlu0 %v203
    %v205 = vpop.xlane.xlu0 %204
    %v206 = vsub.f32 %v193, %v202
    %v207 = vsub.f32 %v196, %v205
    %v208 = vmul.f32 %v206, 1.442695
    %v209 = vpow.pop %v208
    %v210 = vmul.f32 %v207, 1.442695
    %v211 = vpow.pop %v210
    %v212 = vsel %vm199, %v209, 0.0
    %213 = vadd.xlane.f32.xlu0 %v212
    %v214 = vpop.xlane.xlu0 %213
    %v215 = vsel %vm199, %v211, 0.0
    %216 = vadd.xlane.f32.xlu0 %v215
    %v217 = vpop.xlane.xlu0 %216
    %v218 = vrcp.pop %v214
    %v219 = vmul.f32 %v209, %v218
    %v220 = vrcp.pop %v217
    %v221 = vmul.f32 %v211, %v220
    %v222 = vlog2.pop %v214
    %v223 = vmul.f32 %v222, 0.6931472
    %v224 = vlog2.pop %v217
    %v225 = vmul.f32 %v224, 0.6931472
    %v226 = vmul.f32 %v219, %v206
    %v227 = vmul.f32 %v221, %v207
    %v228 = vsel %vm199, %v226, 0.0
    %229 = vadd.xlane.f32.xlu0 %v228
    %v230 = vpop.xlane.xlu0 %229
    %v231 = vsel %vm199, %v227, 0.0
    %232 = vadd.xlane.f32.xlu0 %v231
    %v233 = vpop.xlane.xlu0 %232
    %v234 = vsub.f32 %v223, %v230
    %v235 = vsub.f32 %v225, %v233
    %v236 = vlaneseq
    %v237 = vshrl.u32 %v236, 7
    %v238 = vlaneseq
    %v239 = vand.u32 %v238, 127
    %vm240 = vcmp.le.s32.totalorder %v237, %v239
    %v241 = vsel %vm240, 1, 0
    %v242 = vcvt.s32.f32 %v241
    %v244 = vsel %vm199, %v219, 0
    %v247 = vsel %vm199, %v221, 0
    %249 = vmatprep.subr.mxu0 0.0
    %250 = vmatpush1.msra.mxu0 %v242
    %251 = vmatprep.subr.mxu0 0.0
    %252 = vmatpush1.msra.mxu0 0.0
    %253 = vmatprep.subr.mxu0 0.0
    %254 = vmatpush1.msra.mxu0 0.0
    %255 = vmatprep.subr.mxu0 0.0
    %256 = vmatpush1.msra.mxu0 0.0
    %257 = vmatprep.subr.mxu0 0.0
    %258 = vmatpush1.msra.mxu0 0.0
    %259 = vmatprep.subr.mxu0 0.0
    %260 = vmatpush1.msra.mxu0 0.0
    %261 = vmatprep.subr.mxu0 0.0
    %262 = vmatpush1.msra.mxu0 0.0
    %263 = vmatprep.subr.mxu0 0.0
    %264 = vmatpush1.msra.mxu0 0.0
    %265 = vmatprep.subr.mxu0 0.0
    %266 = vmatpush1.msra.mxu0 0.0
    %267 = vmatprep.subr.mxu0 0.0
    %268 = vmatpush1.msra.mxu0 0.0
    %269 = vmatprep.subr.mxu0 0.0
    %270 = vmatpush1.msra.mxu0 0.0
    %271 = vmatprep.subr.mxu0 0.0
    %272 = vmatpush1.msra.mxu0 0.0
    %273 = vmatprep.subr.mxu0 0.0
    %274 = vmatpush1.msra.mxu0 0.0
    %275 = vmatprep.subr.mxu0 0.0
    %276 = vmatpush1.msra.mxu0 0.0
    %277 = vmatprep.subr.mxu0 0.0
    %278 = vmatpush1.msra.mxu0 0.0
    %279 = vmatprep.subr.mxu0 0.0
    %280 = vmatpush1.msra.mxu0 0.0
    %281 = vmatprep.subr.mxu0 0.0
    %282 = vmatpush1.msra.mxu0 0.0
    %283 = vmatprep.subr.mxu0 0.0
    %284 = vmatpush1.msra.mxu0 0.0
    %285 = vmatprep.subr.mxu0 0.0
    %286 = vmatpush1.msra.mxu0 0.0
    %287 = vmatprep.subr.mxu0 0.0
    %288 = vmatpush1.msra.mxu0 0.0
    %289 = vmatprep.subr.mxu0 0.0
    %290 = vmatpush1.msra.mxu0 0.0
    %291 = vmatprep.subr.mxu0 0.0
    %292 = vmatpush1.msra.mxu0 0.0
    %293 = vmatprep.subr.mxu0 0.0
    %294 = vmatpush1.msra.mxu0 0.0
    %295 = vmatprep.subr.mxu0 0.0
    %296 = vmatpush1.msra.mxu0 0.0
    %297 = vmatprep.subr.mxu0 0.0
    %298 = vmatpush1.msra.mxu0 0.0
    %299 = vmatprep.subr.mxu0 0.0
    %300 = vmatpush1.msra.mxu0 0.0
    %301 = vmatprep.subr.mxu0 0.0
    %302 = vmatpush1.msra.mxu0 0.0
    %303 = vmatprep.subr.mxu0 0.0
    %304 = vmatpush1.msra.mxu0 0.0
    %305 = vmatprep.subr.mxu0 0.0
    %306 = vmatpush1.msra.mxu0 0.0
    %307 = vmatprep.subr.mxu0 0.0
    %308 = vmatpush1.msra.mxu0 0.0
    %309 = vmatprep.subr.mxu0 0.0
    %310 = vmatpush1.msra.mxu0 0.0
    %311 = vmatprep.subr.mxu0 0.0
    %312 = vmatpush1.msra.mxu0 0.0
    %313 = vmatprep.mubr.f32.mxu0 0.0
    %314 = vmatmul.mubr.f32.gmra.mrb[0].mxu0 %v244
    %v315 = vpop.f32.mrb[0].mxu0
    %v316 = vadd.f32 0.0, %v315
    %v317 = vpop.f32.mrb[0].mxu0
    %318 = vmatprep.mubr.f32.mxu0 0.0
    %319 = vmatmul.mubr.f32.gmra.mrb[0].mxu0 %v247
    %v320 = vpop.f32.mrb[0].mxu0
    %v321 = vadd.f32 0.0, %v320
    %v322 = vpop.f32.mrb[0].mxu0
    %323 = vdwg.mxu0
    %325 = vset.pattern.permute.xlu0 0
    %326 = vperm.xlu0 %325, %v56
    %v327 = vpop.permute.xlu0 %326
    %330 = vset.pattern.permute.xlu0 0
    %331 = vperm.xlu0 %330, %v57
    %v332 = vpop.permute.xlu0 %331
    %vm334 = vcmp.ge.f32.partialorder %v327, %v316
    %vm335 = vcmp.ge.f32.partialorder %v332, %v321
    %v336 = vsel %vm334, 1, 0
    %v337 = vsel %vm335, 1, 0
    %v338 = vsel %vm199, %v336, 0
    %v339 = vand.u32 %v338, 65535
    %v340 = vshrl.u32 %v338, 16
    %v341 = vcvt.s32.f32 %v339
    %v342 = vcvt.s32.f32 %v340
    %343 = vadd.xlane.f32.xlu0 %v341
    %v344 = vpop.xlane.xlu0 %343
    %345 = vadd.xlane.f32.xlu0 %v342
    %v346 = vpop.xlane.xlu0 %345
    %v347 = vcvt.f32.s32 %v344
    %v348 = vcvt.f32.s32 %v346
    %v349 = vshll.u32 %v348, 16
    %v350 = vadd.s32 %v349, %v347
    %v351 = vsel %vm199, %v337, 0
    %v352 = vand.u32 %v351, 65535
    %v353 = vshrl.u32 %v351, 16
    %v354 = vcvt.s32.f32 %v352
    %v355 = vcvt.s32.f32 %v353
    %356 = vadd.xlane.f32.xlu0 %v354
    %v357 = vpop.xlane.xlu0 %356
    %358 = vadd.xlane.f32.xlu0 %v355
    %v359 = vpop.xlane.xlu0 %358
    %v360 = vcvt.f32.s32 %v357
    %v361 = vcvt.f32.s32 %v359
    %v362 = vshll.u32 %v361, 16
    %v363 = vadd.s32 %v362, %v360
    %vm364 = vcmp.lt.s32.totalorder %v350, 7
    %v365 = vsel %vm364, %v350, 7
    %vm366 = vcmp.lt.s32.totalorder %v363, 7
    %v367 = vsel %vm366, %v363, 7
    %vm368 = vcmp.eq.s32.totalorder %v239, %v365
    %vm369 = vcmp.eq.s32.totalorder %v239, %v367
    %v370 = vsel %vm368, 1, 0
    %v371 = vsel %vm369, 1, 0
    %v372 = vcvt.s32.f32 %v370
    %v373 = vcvt.s32.f32 %v371
    %v374 = vpack.c.bf16 %v373, %v372
    %v375 = vld [vmem:[#allocation2] sm:$0xf]
    %v377 = vsel %vm199, %v374, 0
    %vm379 = vcmask 1043456
    %v381 = vsel %vm379, %v375, 0
    %383 = vmatprep.subr.bf16.mxu0 0
    %384 = vmatpush1.bf16.msra.mxu0 %v381
    %385 = vmatprep.subr.bf16.mxu0 0
    %386 = vmatpush1.bf16.msra.mxu0 0
    %387 = vmatprep.subr.bf16.mxu0 0
    %388 = vmatpush1.bf16.msra.mxu0 0
    %389 = vmatprep.subr.bf16.mxu0 0
    %390 = vmatpush1.bf16.msra.mxu0 0
    %391 = vmatprep.subr.bf16.mxu0 0
    %392 = vmatpush1.bf16.msra.mxu0 0
    %393 = vmatprep.subr.bf16.mxu0 0
    %394 = vmatpush1.bf16.msra.mxu0 0
    %395 = vmatprep.subr.bf16.mxu0 0
    %396 = vmatpush1.bf16.msra.mxu0 0
    %397 = vmatprep.subr.bf16.mxu0 0
    %398 = vmatpush1.bf16.msra.mxu0 0
    %399 = vmatprep.subr.bf16.mxu0 0
    %400 = vmatpush1.bf16.msra.mxu0 0
    %401 = vmatprep.subr.bf16.mxu0 0
    %402 = vmatpush1.bf16.msra.mxu0 0
    %403 = vmatprep.subr.bf16.mxu0 0
    %404 = vmatpush1.bf16.msra.mxu0 0
    %405 = vmatprep.subr.bf16.mxu0 0
    %406 = vmatpush1.bf16.msra.mxu0 0
    %407 = vmatprep.subr.bf16.mxu0 0
    %408 = vmatpush1.bf16.msra.mxu0 0
    %409 = vmatprep.subr.bf16.mxu0 0
    %410 = vmatpush1.bf16.msra.mxu0 0
    %411 = vmatprep.subr.bf16.mxu0 0
    %412 = vmatpush1.bf16.msra.mxu0 0
    %413 = vmatprep.subr.bf16.mxu0 0
    %414 = vmatpush1.bf16.msra.mxu0 0
    %415 = vmatprep.mubr.bf16.mxu0 0
    %416 = vmatmul.mubr.bf16.gmra.mrb[0].mxu0 %v377
    %v417 = vpop.f32.mrb[0].mxu0
    %v418 = vadd.f32 0.0, %v417
    %v419 = vpop.f32.mrb[0].mxu0
    %v420 = vpop.f32.mrb[0].mxu0
    %v421 = vadd.f32 0.0, %v420
    %v422 = vpop.f32.mrb[0].mxu0
    %423 = vdwg.mxu0
    %v424 = vsel %vm75, %v418, 0.0
    %425 = vadd.xlane.f32.xlu0 %v424
    %v426 = vpop.xlane.xlu0 %425
    %v427 = vsel %vm75, %v421, 0.0
    %428 = vadd.xlane.f32.xlu0 %v427
    %v429 = vpop.xlane.xlu0 %428
    %v430 = vrcp.pop 16.0
    %v431 = vmul.f32 %v426, %v430
    %v432 = vmul.f32 %v429, %v430
    %v433 = vsub.f32 %v418, %v431
    %v434 = vsub.f32 %v421, %v432
    %v435 = vmul.f32 %v433, %v433
    %v436 = vmul.f32 %v434, %v434
    %v437 = vsel %vm75, %v435, 0.0
    %438 = vadd.xlane.f32.xlu0 %v437
    %v439 = vpop.xlane.xlu0 %438
    %v440 = vsel %vm75, %v436, 0.0
    %441 = vadd.xlane.f32.xlu0 %v440
    %v442 = vpop.xlane.xlu0 %441
    %v443 = vmul.f32 %v439, %v430
    %v444 = vmul.f32 %v442, %v430
    %v445 = vadd.f32 %v443, 1e-05
    %v446 = vadd.f32 %v444, 1e-05
    %v447 = vrsqrt.pop %v445
    %v448 = vrsqrt.pop %v446
    %v449 = vmul.f32 %v433, %v447
    %v450 = vmul.f32 %v434, %v448
    %451 = vrot.lane.b32.xlu0 %v124, 88
    %v452 = vpop.permute.xlu0 %451
    %v454 = vmul.f32 %v449, %v452
    %v455 = vmul.f32 %v450, %v452
    %456 = vrot.lane.b32.xlu0 %v124, 72
    %v457 = vpop.permute.xlu0 %456
    %v459 = vadd.f32 %v454, %v457
    %v460 = vadd.f32 %v455, %v457
    %v461 = vpack.c.bf16 %v460, %v459
    %v462 = vld [vmem:[%s6] sm:$0xf]
    %v463 = vld [vmem:[%s6 + $0x4] sm:$0xf]
    %v466 = vunpack.c.l.b16 %v462
    %v467 = vunpack.c.l.b16 %v463
    %v468 = vpack.c.b16 %v467, %v466
    %v471 = vsel %vm75, %v461, 0
    %473 = vmatprep.subr.bf16.mxu0 0
    %474 = vmatpush1.bf16.msra.mxu0 %v468
    %475 = vmatprep.subr.bf16.mxu0 0
    %476 = vmatpush1.bf16.msra.mxu0 0
    %477 = vmatprep.subr.bf16.mxu0 0
    %478 = vmatpush1.bf16.msra.mxu0 0
    %479 = vmatprep.subr.bf16.mxu0 0
    %480 = vmatpush1.bf16.msra.mxu0 0
    %481 = vmatprep.subr.bf16.mxu0 0
    %482 = vmatpush1.bf16.msra.mxu0 0
    %483 = vmatprep.subr.bf16.mxu0 0
    %484 = vmatpush1.bf16.msra.mxu0 0
    %485 = vmatprep.subr.bf16.mxu0 0
    %486 = vmatpush1.bf16.msra.mxu0 0
    %487 = vmatprep.subr.bf16.mxu0 0
    %488 = vmatpush1.bf16.msra.mxu0 0
    %489 = vmatprep.subr.bf16.mxu0 0
    %490 = vmatpush1.bf16.msra.mxu0 0
    %491 = vmatprep.subr.bf16.mxu0 0
    %492 = vmatpush1.bf16.msra.mxu0 0
    %493 = vmatprep.subr.bf16.mxu0 0
    %494 = vmatpush1.bf16.msra.mxu0 0
    %495 = vmatprep.subr.bf16.mxu0 0
    %496 = vmatpush1.bf16.msra.mxu0 0
    %497 = vmatprep.subr.bf16.mxu0 0
    %498 = vmatpush1.bf16.msra.mxu0 0
    %499 = vmatprep.subr.bf16.mxu0 0
    %500 = vmatpush1.bf16.msra.mxu0 0
    %501 = vmatprep.subr.bf16.mxu0 0
    %502 = vmatpush1.bf16.msra.mxu0 0
    %503 = vmatprep.subr.bf16.mxu0 0
    %504 = vmatpush1.bf16.msra.mxu0 0
    %505 = vmatprep.mubr.bf16.mxu0 0
    %506 = vmatmul.mubr.bf16.gmra.mrb[0].mxu0 %v471
    %v507 = vpop.f32.mrb[0].mxu0
    %v508 = vadd.f32 0.0, %v507
    %v509 = vpop.f32.mrb[0].mxu0
    %v510 = vpop.f32.mrb[0].mxu0
    %v511 = vadd.f32 0.0, %v510
    %v512 = vpop.f32.mrb[0].mxu0
    %513 = vdwg.mxu0
    %516 = vrot.lane.b32.xlu0 %v508, 32
    %v517 = vpop.permute.xlu0 %516
    %518 = vrot.lane.b32.xlu0 %v511, 32
    %v519 = vpop.permute.xlu0 %518
    %v522 = vadd.f32 %v114, %v517
    %v523 = vadd.f32 %v117, %v519
    %v524 = vadd.f32 %v522, %v452
    %v525 = vadd.f32 %v523, %v452
    %v526 = vmax.f32 %v524, 0.0
    %v527 = vmax.f32 %v525, 0.0
    %v528 = vpack.c.bf16 %v527, %v526
    %v529 = vld [vmem:[%s7] sm:$0xf]
    %v530 = vld [vmem:[%s7 + $0x4] sm:$0xf]
    %v531 = vld [vmem:[%s7 + $0x8] sm:$0xf]
    %v532 = vld [vmem:[%s7 + $0xc] sm:$0xf]
    %v534 = vlaneseq
    %v535 = vshrl.u32 %v534, 7
    %v536 = vsub.s32 0, %v535
    %v537 = vrot.slane %v59, %v536
    %v538 = vlaneseq
    %v539 = vshrl.u32 %v538, 7
    %v540 = vsub.s32 1, %v539
    %v541 = vrot.slane %v59, %v540
    %543 = vrot.lane.b32.xlu0 %v528, 96
    %v544 = vpop.permute.xlu0 %543
    %v549 = vunpack.c.l.b16 %v529
    %v550 = vunpack.c.l.b16 %v530
    %v551 = vunpack.c.l.b16 %v531
    %v552 = vunpack.c.l.b16 %v532
    %v553 = vpack.c.b16 %v550, %v549
    %v554 = vpack.c.b16 %v552, %v551
    %557 = vrot.lane.b32.xlu0 %v537, 24
    %v558 = vpop.permute.xlu0 %557
    %559 = vrot.lane.b32.xlu0 %v541, 24
    %v560 = vpop.permute.xlu0 %559
    %vm561 = vcmask 195584
    %v562 = vsel %vm561, %v558, %v560
    %v565 = vsel %vm154, %v544, 0
    %567 = vmatprep.subr.bf16.mxu0 0
    %568 = vmatpush1.bf16.msra.mxu0 %v553
    %569 = vmatprep.subr.bf16.mxu0 0
    %570 = vmatpush1.bf16.msra.mxu0 %v554
    %571 = vmatprep.subr.bf16.mxu0 0
    %572 = vmatpush1.bf16.msra.mxu0 0
    %573 = vmatprep.subr.bf16.mxu0 0
    %574 = vmatpush1.bf16.msra.mxu0 0
    %575 = vmatprep.subr.bf16.mxu0 0
    %576 = vmatpush1.bf16.msra.mxu0 0
    %577 = vmatprep.subr.bf16.mxu0 0
    %578 = vmatpush1.bf16.msra.mxu0 0
    %579 = vmatprep.subr.bf16.mxu0 0
    %580 = vmatpush1.bf16.msra.mxu0 0
    %581 = vmatprep.subr.bf16.mxu0 0
    %582 = vmatpush1.bf16.msra.mxu0 0
    %583 = vmatprep.subr.bf16.mxu0 0
    %584 = vmatpush1.bf16.msra.mxu0 0
    %585 = vmatprep.subr.bf16.mxu0 0
    %586 = vmatpush1.bf16.msra.mxu0 0
    %587 = vmatprep.subr.bf16.mxu0 0
    %588 = vmatpush1.bf16.msra.mxu0 0
    %589 = vmatprep.subr.bf16.mxu0 0
    %590 = vmatpush1.bf16.msra.mxu0 0
    %591 = vmatprep.subr.bf16.mxu0 0
    %592 = vmatpush1.bf16.msra.mxu0 0
    %593 = vmatprep.subr.bf16.mxu0 0
    %594 = vmatpush1.bf16.msra.mxu0 0
    %595 = vmatprep.subr.bf16.mxu0 0
    %596 = vmatpush1.bf16.msra.mxu0 0
    %597 = vmatprep.subr.bf16.mxu0 0
    %598 = vmatpush1.bf16.msra.mxu0 0
    %599 = vmatprep.mubr.bf16.mxu0 0
    %600 = vmatmul.mubr.bf16.gmra.mrb[0].mxu0 %v565
    %v601 = vpop.f32.mrb[0].mxu0
    %v602 = vadd.f32 %v562, %v601
    %v603 = vpop.f32.mrb[0].mxu0
    %v604 = vpop.f32.mrb[0].mxu0
    %v605 = vadd.f32 %v562, %v604
    %v606 = vpop.f32.mrb[0].mxu0
    %607 = vdwg.mxu0
    %v608 = vpack.c.bf16 %v55, %v54
    %v609 = vld [vmem:[%s8] sm:$0xf]
    %v610 = vld [vmem:[%s8 + $0x4] sm:$0xf]
    %v611 = vld [vmem:[%s8 + $0x8] sm:$0xf]
    %v612 = vld [vmem:[%s8 + $0xc] sm:$0xf]
    %v614 = vlaneseq
    %v615 = vshrl.u32 %v614, 7
    %v616 = vsub.s32 0, %v615
    %v617 = vrot.slane %v60, %v616
    %v618 = vlaneseq
    %v619 = vshrl.u32 %v618, 7
    %v620 = vsub.s32 1, %v619
    %v621 = vrot.slane %v60, %v620
    %v626 = vunpack.c.l.b16 %v609
    %v627 = vunpack.c.l.b16 %v610
    %v628 = vunpack.c.l.b16 %v611
    %v629 = vunpack.c.l.b16 %v612
    %v630 = vpack.c.b16 %v627, %v626
    %v631 = vpack.c.b16 %v629, %v628
    %634 = vrot.lane.b32.xlu0 %v617, 56
    %v635 = vpop.permute.xlu0 %634
    %636 = vrot.lane.b32.xlu0 %v621, 56
    %v637 = vpop.permute.xlu0 %636
    %vm638 = vcmask 457728
    %v639 = vsel %vm638, %v635, %v637
    %v642 = vsel %vm154, %v608, 0
    %644 = vmatprep.subr.bf16.mxu0 0
    %645 = vmatpush1.bf16.msra.mxu0 %v630
    %646 = vmatprep.subr.bf16.mxu0 0
    %647 = vmatpush1.bf16.msra.mxu0 %v631
    %648 = vmatprep.subr.bf16.mxu0 0
    %649 = vmatpush1.bf16.msra.mxu0 0
    %650 = vmatprep.subr.bf16.mxu0 0
    %651 = vmatpush1.bf16.msra.mxu0 0
    %652 = vmatprep.subr.bf16.mxu0 0
    %653 = vmatpush1.bf16.msra.mxu0 0
    %654 = vmatprep.subr.bf16.mxu0 0
    %655 = vmatpush1.bf16.msra.mxu0 0
    %656 = vmatprep.subr.bf16.mxu0 0
    %657 = vmatpush1.bf16.msra.mxu0 0
    %658 = vmatprep.subr.bf16.mxu0 0
    %659 = vmatpush1.bf16.msra.mxu0 0
    %660 = vmatprep.subr.bf16.mxu0 0
    %661 = vmatpush1.bf16.msra.mxu0 0
    %662 = vmatprep.subr.bf16.mxu0 0
    %663 = vmatpush1.bf16.msra.mxu0 0
    %664 = vmatprep.subr.bf16.mxu0 0
    %665 = vmatpush1.bf16.msra.mxu0 0
    %666 = vmatprep.subr.bf16.mxu0 0
    %667 = vmatpush1.bf16.msra.mxu0 0
    %668 = vmatprep.subr.bf16.mxu0 0
    %669 = vmatpush1.bf16.msra.mxu0 0
    %670 = vmatprep.subr.bf16.mxu0 0
    %671 = vmatpush1.bf16.msra.mxu0 0
    %672 = vmatprep.subr.bf16.mxu0 0
    %673 = vmatpush1.bf16.msra.mxu0 0
    %674 = vmatprep.subr.bf16.mxu0 0
    %675 = vmatpush1.bf16.msra.mxu0 0
    %676 = vmatprep.mubr.bf16.mxu0 0
    %677 = vmatmul.mubr.bf16.gmra.mrb[0].mxu0 %v642
    %v678 = vpop.f32.mrb[0].mxu0
    %v679 = vadd.f32 %v639, %v678
    %v680 = vpop.f32.mrb[0].mxu0
    %v681 = vpop.f32.mrb[0].mxu0
    %v682 = vadd.f32 %v639, %v681
    %v683 = vpop.f32.mrb[0].mxu0
    %684 = vdwg.mxu0
    %v685 = vadd.f32 %v602, %v679
    %v686 = vadd.f32 %v605, %v682
    %v687 = vmul.f32 %v685, 0.5
    %v688 = vmul.f32 %v686, 0.5
    %v689 = vtanh.pop %v687
    %v690 = vtanh.pop %v688
    %v691 = vmul.f32 %v689, 0.5
    %v692 = vmul.f32 %v690, 0.5
    %v693 = vadd.f32 %v691, 0.5
    %v694 = vadd.f32 %v692, 0.5
    %697 = vrot.lane.b32.xlu0 %v679, 64
    %v698 = vpop.permute.xlu0 %697
    %699 = vrot.lane.b32.xlu0 %v682, 64
    %v700 = vpop.permute.xlu0 %699
    %v703 = vmul.f32 %v693, %v698
    %v704 = vmul.f32 %v694, %v700
    %707 = vrot.lane.b32.xlu0 %v703, 64
    %v708 = vpop.permute.xlu0 %707
    %709 = vrot.lane.b32.xlu0 %v704, 64
    %v710 = vpop.permute.xlu0 %709
    %v713 = vadd.f32 %v602, %v708
    %v714 = vadd.f32 %v605, %v710
    %v715 = vtanh.pop %v713
    %v716 = vtanh.pop %v714
    %v717 = vsub.f32 1.0, %v693
    %v718 = vsub.f32 1.0, %v694
    %721 = vrot.lane.b32.xlu0 %v715, 96
    %v722 = vpop.permute.xlu0 %721
    %723 = vrot.lane.b32.xlu0 %v716, 96
    %v724 = vpop.permute.xlu0 %723
    %v727 = vmul.f32 %v717, %v722
    %v728 = vmul.f32 %v718, %v724
    %731 = vrot.lane.b32.xlu0 %v54, 32
    %v732 = vpop.permute.xlu0 %731
    %733 = vrot.lane.b32.xlu0 %v55, 32
    %v734 = vpop.permute.xlu0 %733
    %v737 = vmul.f32 %v693, %v732
    %v738 = vmul.f32 %v694, %v734
    %v739 = vadd.f32 %v727, %v737
    %v740 = vadd.f32 %v728, %v738
    %v741 = vpack.c.bf16 %v740, %v739
    %v742 = vld [vmem:[%s9] sm:$0xf]
    %v743 = vld [vmem:[%s9 + $0x4] sm:$0xf]
    %v744 = vld [vmem:[%s9 + $0x8] sm:$0xf]
    %v745 = vld [vmem:[%s9 + $0xc] sm:$0xf]
    %v747 = vlaneseq
    %v748 = vshrl.u32 %v747, 7
    %v749 = vsub.s32 0, %v748
    %v750 = vrot.slane %v61, %v749
    %752 = vrot.lane.b32.xlu0 %v741, 96
    %v753 = vpop.permute.xlu0 %752
    %v758 = vunpack.c.l.b16 %v742
    %v759 = vunpack.c.l.b16 %v743
    %v760 = vunpack.c.l.b16 %v744
    %v761 = vunpack.c.l.b16 %v745
    %v762 = vpack.c.b16 %v759, %v758
    %v763 = vpack.c.b16 %v761, %v760
    %766 = vrot.lane.b32.xlu0 %v750, 88
    %v767 = vpop.permute.xlu0 %766
    %v770 = vsel %vm154, %v753, 0
    %772 = vmatprep.subr.bf16.mxu0 0
    %773 = vmatpush1.bf16.msra.mxu0 %v762
    %774 = vmatprep.subr.bf16.mxu0 0
    %775 = vmatpush1.bf16.msra.mxu0 %v763
    %776 = vmatprep.subr.bf16.mxu0 0
    %777 = vmatpush1.bf16.msra.mxu0 0
    %778 = vmatprep.subr.bf16.mxu0 0
    %779 = vmatpush1.bf16.msra.mxu0 0
    %780 = vmatprep.subr.bf16.mxu0 0
    %781 = vmatpush1.bf16.msra.mxu0 0
    %782 = vmatprep.subr.bf16.mxu0 0
    %783 = vmatpush1.bf16.msra.mxu0 0
    %784 = vmatprep.subr.bf16.mxu0 0
    %785 = vmatpush1.bf16.msra.mxu0 0
    %786 = vmatprep.subr.bf16.mxu0 0
    %787 = vmatpush1.bf16.msra.mxu0 0
    %788 = vmatprep.subr.bf16.mxu0 0
    %789 = vmatpush1.bf16.msra.mxu0 0
    %790 = vmatprep.subr.bf16.mxu0 0
    %791 = vmatpush1.bf16.msra.mxu0 0
    %792 = vmatprep.subr.bf16.mxu0 0
    %793 = vmatpush1.bf16.msra.mxu0 0
    %794 = vmatprep.subr.bf16.mxu0 0
    %795 = vmatpush1.bf16.msra.mxu0 0
    %796 = vmatprep.subr.bf16.mxu0 0
    %797 = vmatpush1.bf16.msra.mxu0 0
    %798 = vmatprep.subr.bf16.mxu0 0
    %799 = vmatpush1.bf16.msra.mxu0 0
    %800 = vmatprep.subr.bf16.mxu0 0
    %801 = vmatpush1.bf16.msra.mxu0 0
    %802 = vmatprep.subr.bf16.mxu0 0
    %803 = vmatpush1.bf16.msra.mxu0 0
    %804 = vmatprep.mubr.bf16.mxu0 0
    %805 = vmatmul.mubr.bf16.gmra.mrb[0].mxu0 %v770
    %v806 = vpop.f32.mrb[0].mxu0
    %v807 = vadd.f32 %v767, %v806
    %v808 = vpop.f32.mrb[0].mxu0
    %v809 = vpop.f32.mrb[0].mxu0
    %v810 = vadd.f32 %v767, %v809
    %v811 = vpop.f32.mrb[0].mxu0
    %812 = vdwg.mxu0
    %815 = vrot.lane.b32.xlu0 %v739, 96
    %v816 = vpop.permute.xlu0 %815
    %817 = vrot.lane.b32.xlu0 %v740, 96
    %v818 = vpop.permute.xlu0 %817
    %823 = vrot.lane.b32.xlu0 %v459, 32
    %v824 = vpop.permute.xlu0 %823
    %825 = vrot.lane.b32.xlu0 %v460, 32
    %v826 = vpop.permute.xlu0 %825
    %831 = vrot.lane.b32.xlu0 %v807, 48
    %v832 = vpop.permute.xlu0 %831
    %833 = vrot.lane.b32.xlu0 %v810, 48
    %v834 = vpop.permute.xlu0 %833
    %v837 = vsel %vm154, %v816, %v824
    %v838 = vsel %vm154, %v818, %v826
    %vm839 = vcmask 392192
    %v840 = vsel %vm839, %v837, %v832
    %v841 = vsel %vm839, %v838, %v834
    %v842 = vsel %vm638, %v840, %v234
    %v843 = vsel %vm638, %v841, %v235
    %vm844 = vcmask 465920
    %v845 = vsel %vm844, %v842, 0.0
    %v846 = vsel %vm844, %v843, 0.0
    %847 = vst [vmem:[#allocation5] sm:$0xff] %v845
    %848 = vst [vmem:[#allocation5 + $0x8] sm:$0xff] %v846
    // Predicated region
    $region50: #{tpu_custom_call.1} parent=1 // pred_check
      _
    $region51: #{tpu_custom_call.1} parent=1 // pred_check_branch
      %850 = sbr.rel (0) target = $region53
    $region52: #{tpu_custom_call.1} parent=1 // pred_region
      %s852 = ssub.s32 256, 256
      %853 = vsyncadd [#allocation4], %s852
      %s854 = sshll.u32 [#allocation5], 4
      %s855 = int_to_ptr.vmem [resolvable:$true] %s854
      %860 = dma.vmem_to_hbm [thread:$0]  %s855, 256, %s11, [#allocation4], 128, 128, 8
    $region53: #{tpu_custom_call.1} parent=1 // pred_fallthru
      _
    // Predicated region
    $region54: #{tpu_custom_call.1} parent=1 // pred_check
      _
    $region55: #{tpu_custom_call.1} parent=1 // pred_check_branch
      %862 = sbr.rel (0) target = $region57
    $region56: #{tpu_custom_call.1} parent=1 // pred_region
      %863 = dma.done [#allocation4], 256
    $region57: #{tpu_custom_call.1} parent=1 // pred_fallthru
      _
    %864 = vsyncpa [#allocation3], 1
    %865 = vsyncpa [#allocation4], 1

</llo_original>
